<compile_context>
chip_gen: v5e
topology: v5e:2x2
jax: 0.10.0
libtpu: 0.0.40
codegen_flags: <defaults>
</compile_context>

<pallas_src>
import math

import jax
import jax.numpy as jnp
from jax.experimental import pallas as pl
from jax.experimental.pallas import tpu as pltpu


def _make_divisible(x, divisor=4):
    return int(math.ceil(x * 1.0 / divisor) * divisor)


def _se_kernel(x_ref, w1_ref, b1_ref, w2_ref, b2_ref, o_ref):
    # x_ref block: (B_TILE, C, HW); lane axis = H*W.
    xs = x_ref[...]                                            # native dtype

    # Global average pool: lane-axis sum with f32 accumulation.
    # (The 1/HW scale is folded into w1 in the wrapper.)
    pooled = jnp.sum(xs.astype(jnp.float32), axis=2)           # (B_TILE, C)

    # conv_reduce (1x1 conv == channel FC) + ReLU, batched over B_TILE rows.
    h = jnp.dot(pooled, w1_ref[...],
                preferred_element_type=jnp.float32) + b1_ref[...]   # (B_TILE, M)
    h = jnp.maximum(h, 0.0)

    # conv_expand + hard-sigmoid: relu6(g + 3) * 0.16666667 (PyTorch constant).
    g = jnp.dot(h, w2_ref[...],
                preferred_element_type=jnp.float32) + b2_ref[...]   # (B_TILE, C)
    gate = jnp.clip(g + 3.0, 0.0, 6.0) * 0.16666667

    # Channel-wise scale, broadcast along the lane (spatial) axis.
    # Multiply in x's dtype; only the tiny gate is cast.
    o_ref[...] = xs * gate.astype(xs.dtype)[:, :, None]


def _pick_b_tile(n, c, hw, itemsize):
    """Largest batch tile that (a) targets ~1 MiB streamed blocks, (b) keeps
    in+out double-buffering well under scoped VMEM, (c) leaves >=2 grid steps
    so v7x's two TensorCores both get work."""
    per_image = max(1, c * hw * itemsize)
    target_bytes = 1 << 20                 # ~1 MiB block: >=85% of HBM roofline
    vmem_budget = 16 << 20                 # 4x block (in+out, double-buffered)
    bt = min(target_bytes // per_image, vmem_budget // (4 * per_image))
    bt = max(1, bt)
    if n >= 2:
        bt = min(bt, -(-n // 2))           # keep at least 2 grid steps
    return max(1, min(bt, n))


def se_forward(x, w1, b1, w2, b2):
    """Fused SE forward.

    x : (N, C, H, W)  NCHW, like the PyTorch module.
    w1: (M, C)  conv_reduce weight (1x1 conv squeezed), b1: (M,)
    w2: (C, M)  conv_expand weight (1x1 conv squeezed), b2: (C,)
    """
    N, C, H, W = x.shape
    HW = H * W
    M = w1.shape[0]
    itemsize = jnp.dtype(x.dtype).itemsize

    x3 = x.reshape(N, C, HW)                               # lane axis = H*W

    # Pre-transpose weights for batched (rows = batch) matmuls and fold the
    # 1/HW pooling scale into w1.
    w1f = (w1.astype(jnp.float32) * (1.0 / HW)).T          # (C, M)
    w2f = w2.astype(jnp.float32).T                         # (M, C)
    b1r = b1.reshape(1, M).astype(jnp.float32)
    b2r = b2.reshape(1, C).astype(jnp.float32)

    bt = _pick_b_tile(N, C, HW, itemsize)
    grid = (pl.cdiv(N, bt),)

    cost = pl.CostEstimate(
        flops=2 * N * C * HW + 2 * N * C * M + 2 * N * M * C,
        transcendentals=0,
        bytes_accessed=2 * N * C * HW * itemsize + (2 * C * M + M + C) * 4,
    )

    out = pl.pallas_call(
        _se_kernel,
        out_shape=jax.ShapeDtypeStruct((N, C, HW), x.dtype),
        grid_spec=pltpu.PrefetchScalarGridSpec(
            num_scalar_prefetch=0,
            grid=grid,
            in_specs=[
                pl.BlockSpec((bt, C, HW), lambda n: (n, 0, 0)),   # x (streamed)
                pl.BlockSpec((C, M), lambda n: (0, 0)),           # w1^T / HW (resident)
                pl.BlockSpec((1, M), lambda n: (0, 0)),           # b1
                pl.BlockSpec((M, C), lambda n: (0, 0)),           # w2^T
                pl.BlockSpec((1, C), lambda n: (0, 0)),           # b2
            ],
            out_specs=pl.BlockSpec((bt, C, HW), lambda n: (n, 0, 0)),
        ),
        compiler_params=pltpu.CompilerParams(
            dimension_semantics=("parallel",),        # batch axis -> both v7x TCs
            vmem_limit_bytes=32 * 1024 * 1024,        # explicit: safe on v5e/v6e/v7x
        ),
        cost_estimate=cost,
    )(x3, w1f, b1r, w2f, b2r)

    return out.reshape(N, C, H, W)


def se_ref(x, w1, b1, w2, b2):
    """Pure-JAX reference matching the PyTorch SE.forward semantics."""
    xf = x.astype(jnp.float32)
    pooled = jnp.mean(xf, axis=(2, 3))                        # (N, C)
    h = jnp.maximum(pooled @ w1.T + b1, 0.0)                  # (N, M)
    g = h @ w2.T + b2                                         # (N, C)
    gate = jnp.clip(g + 3.0, 0.0, 6.0) * 0.16666667
    return (xf * gate[:, :, None, None]).astype(x.dtype)


if __name__ == "__main__":
    key = jax.random.PRNGKey(0)
    N, C, H, W = 2, 4, 16, 16
    M = _make_divisible(C // 4)   # num_mid = 4 (as in SE(num_out=4, ratio=4))

    kx, k1, k2, k3, k4 = jax.random.split(key, 5)
    x = jax.random.normal(kx, (N, C, H, W), dtype=jnp.float32)
    w1 = jax.random.normal(k1, (M, C), dtype=jnp.float32) * 0.5
    b1 = jax.random.normal(k2, (M,), dtype=jnp.float32) * 0.1
    w2 = jax.random.normal(k3, (C, M), dtype=jnp.float32) * 0.5
    b2 = jax.random.normal(k4, (C,), dtype=jnp.float32) * 0.1

    y = se_forward(x, w1, b1, w2, b2)
    y = jax.block_until_ready(y)

    y_ref = se_ref(x, w1, b1, w2, b2)
    assert y.shape == x.shape and y.dtype == x.dtype
    assert jnp.allclose(y, y_ref, atol=1e-5, rtol=1e-5)

    print("KERNEL_OK")
</pallas_src>

<mosaic_0001>
module attributes {stable_mosaic.version = 11 : i64} {
  func.func @_se_kernel(%arg0: i32, %arg1: memref<1x4x256xf32, #tpu.memory_space<vmem>>, %arg2: memref<4x4xf32, #tpu.memory_space<vmem>>, %arg3: memref<1x4xf32, #tpu.memory_space<vmem>>, %arg4: memref<4x4xf32, #tpu.memory_space<vmem>>, %arg5: memref<1x4xf32, #tpu.memory_space<vmem>>, %arg6: memref<1x4x256xf32, #tpu.memory_space<vmem>>) attributes {dimension_semantics = [#tpu.dimension_semantics<parallel>], iteration_bounds = array<i64: 2>, scalar_prefetch = 0 : i64, scratch_operands = 0 : i64, tpu.core_type = #tpu.core_type<tc>, window_params = [{transform_indices = @transform_0, window_bounds = array<i64: 1, 4, 256>}, {pipeline_mode = #tpu.pipeline_mode<synchronous>, transform_indices = @transform_1, window_bounds = array<i64: 4, 4>}, {pipeline_mode = #tpu.pipeline_mode<synchronous>, transform_indices = @transform_2, window_bounds = array<i64: 1, 4>}, {pipeline_mode = #tpu.pipeline_mode<synchronous>, transform_indices = @transform_3, window_bounds = array<i64: 4, 4>}, {pipeline_mode = #tpu.pipeline_mode<synchronous>, transform_indices = @transform_4, window_bounds = array<i64: 1, 4>}, {transform_indices = @transform_5, window_bounds = array<i64: 1, 4, 256>}]} {
    %c0 = arith.constant 0 : index
    %c0_0 = arith.constant 0 : index
    %c0_1 = arith.constant 0 : index
    %0 = vector.load %arg1[%c0, %c0_0, %c0_1] : memref<1x4x256xf32, #tpu.memory_space<vmem>>, vector<1x4x256xf32>
    %cst = arith.constant dense<0.000000e+00> : vector<1x4xf32>
    %1 = vector.multi_reduction <add>, %0, %cst [2] : vector<1x4x256xf32> to vector<1x4xf32>
    %c0_2 = arith.constant 0 : index
    %c0_3 = arith.constant 0 : index
    %2 = vector.load %arg2[%c0_2, %c0_3] : memref<4x4xf32, #tpu.memory_space<vmem>>, vector<4x4xf32>
    %cst_4 = arith.constant dense<0.000000e+00> : vector<1x4xf32>
    %3 = tpu.matmul %1, %2, %cst_4 {dimension_numbers = #tpu.dot_dimension_numbers<[1], [0], [0], [1], [0, 0, 1, 1], [], []>} : vector<1x4xf32>, vector<4x4xf32>, vector<1x4xf32> -> vector<1x4xf32>
    %c0_5 = arith.constant 0 : index
    %c0_6 = arith.constant 0 : index
    %4 = vector.load %arg3[%c0_5, %c0_6] : memref<1x4xf32, #tpu.memory_space<vmem>>, vector<1x4xf32>
    %5 = arith.addf %3, %4 : vector<1x4xf32>
    %cst_7 = arith.constant 0.000000e+00 : f32
    %6 = vector.broadcast %cst_7 : f32 to vector<1x4xf32>
    %7 = arith.maximumf %5, %6 : vector<1x4xf32>
    %c0_8 = arith.constant 0 : index
    %c0_9 = arith.constant 0 : index
    %8 = vector.load %arg4[%c0_8, %c0_9] : memref<4x4xf32, #tpu.memory_space<vmem>>, vector<4x4xf32>
    %cst_10 = arith.constant dense<0.000000e+00> : vector<1x4xf32>
    %9 = tpu.matmul %7, %8, %cst_10 {dimension_numbers = #tpu.dot_dimension_numbers<[1], [0], [0], [1], [0, 0, 1, 1], [], []>} : vector<1x4xf32>, vector<4x4xf32>, vector<1x4xf32> -> vector<1x4xf32>
    %c0_11 = arith.constant 0 : index
    %c0_12 = arith.constant 0 : index
    %10 = vector.load %arg5[%c0_11, %c0_12] : memref<1x4xf32, #tpu.memory_space<vmem>>, vector<1x4xf32>
    %11 = arith.addf %9, %10 : vector<1x4xf32>
    %cst_13 = arith.constant 3.000000e+00 : f32
    %12 = vector.broadcast %cst_13 : f32 to vector<1x4xf32>
    %13 = arith.addf %11, %12 : vector<1x4xf32>
    %cst_14 = arith.constant 0.000000e+00 : f32
    %cst_15 = arith.constant 6.000000e+00 : f32
    %14 = vector.broadcast %cst_14 : f32 to vector<1x4xf32>
    %15 = arith.maximumf %14, %13 : vector<1x4xf32>
    %16 = vector.broadcast %cst_15 : f32 to vector<1x4xf32>
    %17 = arith.minimumf %16, %15 : vector<1x4xf32>
    %cst_16 = arith.constant 0.166666672 : f32
    %18 = vector.broadcast %cst_16 : f32 to vector<1x4xf32>
    %19 = arith.mulf %17, %18 : vector<1x4xf32>
    %20 = vector.shape_cast %19 : vector<1x4xf32> to vector<1x4x1xf32>
    %21 = vector.broadcast %20 : vector<1x4x1xf32> to vector<1x4x256xf32>
    %22 = arith.mulf %0, %21 : vector<1x4x256xf32>
    %c0_17 = arith.constant 0 : index
    %c0_18 = arith.constant 0 : index
    %c0_19 = arith.constant 0 : index
    %23 = vector.load %arg6[%c0_17, %c0_18, %c0_19] : memref<1x4x256xf32, #tpu.memory_space<vmem>>, vector<1x4x256xf32>
    tpu.vector_store %arg6[%c0_17, %c0_18, %c0_19], %22 {strides = array<i32>} : memref<1x4x256xf32, #tpu.memory_space<vmem>>, vector<1x4x256xf32>,
    return
  }
  func.func @transform_0(%arg0: i32) -> (i32, i32, i32) {
    %c0_i32 = arith.constant 0 : i32
    %c0_i32_0 = arith.constant 0 : i32
    %c0_i32_1 = arith.constant 0 : i32
    return %arg0, %c0_i32, %c0_i32_0 : i32, i32, i32
  }
  func.func @transform_1(%arg0: i32) -> (i32, i32) {
    %c0_i32 = arith.constant 0 : i32
    %c0_i32_0 = arith.constant 0 : i32
    %c0_i32_1 = arith.constant 0 : i32
    return %c0_i32, %c0_i32_0 : i32, i32
  }
  func.func @transform_2(%arg0: i32) -> (i32, i32) {
    %c0_i32 = arith.constant 0 : i32
    %c0_i32_0 = arith.constant 0 : i32
    %c0_i32_1 = arith.constant 0 : i32
    return %c0_i32, %c0_i32_0 : i32, i32
  }
  func.func @transform_3(%arg0: i32) -> (i32, i32) {
    %c0_i32 = arith.constant 0 : i32
    %c0_i32_0 = arith.constant 0 : i32
    %c0_i32_1 = arith.constant 0 : i32
    return %c0_i32, %c0_i32_0 : i32, i32
  }
  func.func @transform_4(%arg0: i32) -> (i32, i32) {
    %c0_i32 = arith.constant 0 : i32
    %c0_i32_0 = arith.constant 0 : i32
    %c0_i32_1 = arith.constant 0 : i32
    return %c0_i32, %c0_i32_0 : i32, i32
  }
  func.func @transform_5(%arg0: i32) -> (i32, i32, i32) {
    %c0_i32 = arith.constant 0 : i32
    %c0_i32_0 = arith.constant 0 : i32
    %c0_i32_1 = arith.constant 0 : i32
    return %arg0, %c0_i32, %c0_i32_0 : i32, i32, i32
  }
}

</mosaic_0001>

<llo_original>
// kernel: tpu_custom_call.1
$region0: #{tpu_custom_call.1}
  #allocation0 [shape = 'u32[]', space=smem, size = 0x4, offset = 0x4, fixed_abs, tag = 'smem constant byte address 0x4 - core index']
  #allocation1 [shape = 'u32[72,128]{1,0:T(1,128)}', space=vmem, size = 0x9000, scoped, tag = 'internal scratch']
  %s0 = inlined_call_operand.hbm [shape: f32[2,4,256], index: 0, kind: input, shape index: {}]
  %s1 = inlined_call_operand.hbm [shape: f32[4,4], index: 1, kind: input, shape index: {}]
  %s2 = inlined_call_operand.vmem [shape: f32[1,4], index: 2, kind: input, shape index: {}]
  %s3 = inlined_call_operand.hbm [shape: f32[4,4], index: 3, kind: input, shape index: {}]
  %s4 = inlined_call_operand.vmem [shape: f32[1,4], index: 4, kind: input, shape index: {}]
  %s5 = inlined_call_operand.hbm [shape: f32[2,4,256], index: 5, kind: output, shape index: {}]
  %s6 = sld [smem:[#allocation0]]
  $region65: #{tpu_custom_call.1} parent=0
    _
  %s8 = ssub.s32 1, %s6
  %s9 = scalar_select 0, %s8, %s6
  $region1: #{tpu_custom_call.1} parent=0
    #allocation2 [shape = 'u8[8192]{0}', space=vmem, size = 0x2000, scoped, tag = 'input window, operand 0']
    #allocation3 [shape = 's32[2]{0}', space=sflag, size = 0x8, scoped, tag = 'scoped memory for tpu_custom_call.1']
    #allocation4 [shape = 's32[2]{0}', space=sflag, size = 0x8, scoped, tag = 'scoped memory for tpu_custom_call.1']
    #allocation5 [shape = 'u8[2048]{0}', space=vmem, size = 0x800, scoped, tag = 'input window, operand 1, single buffered']
    #allocation6 [shape = 's32[1]{0}', space=sflag, size = 0x4, scoped, tag = 'scoped memory for tpu_custom_call.1']
    #allocation7 [shape = 'u8[2048]{0}', space=vmem, size = 0x800, scoped, tag = 'input window, operand 3, single buffered']
    #allocation8 [shape = 'u8[8192]{0}', space=vmem, size = 0x2000, scoped, tag = 'output window, operand 0']
    %10 = vsyncpa [#allocation3], 0
    %s11 = scalar_lea.sflag [#allocation3], 1
    %12 = vsyncpa %s11, 0
    %13 = vsyncpa [#allocation6], 0
    %14 = vsyncpa [#allocation4], 0
    %s15 = scalar_lea.sflag [#allocation4], 1
    %16 = vsyncpa %s15, 0
    loop: start=0, step=1, limit=4
    $region2: #{tpu_custom_call.1} parent=1 // loop_pre_header
      _
    $region3: #{tpu_custom_call.1} parent=1 // loop_header
      %s18 = sphi 0, %s22
      %p19 = scmp.ge.s32.totalorder %s18, 4
      %s28 = sphi 0, %s30
      %s31 = sphi 0, %s28
      %s32 = sphi 0, %s31
      %s48 = sphi 0, %s32
      %s52 = sphi 0, %s52
      %s54 = sphi 0, %s52
      %s55 = sphi 0, %s54
      %s69 = sphi 0, %s55
      %s73 = sphi 0, %s73
      %s75 = sphi 0, %s73
      %s76 = sphi 0, %s75
      %s90 = sphi 0, %s76
      %s94 = sphi 0, %s94
      %s96 = sphi 0, %s94
      %s97 = sphi 0, %s96
      %s111 = sphi 0, %s97
      %s115 = sphi 0, %s115
      %s117 = sphi 0, %s115
      %s118 = sphi 0, %s117
      %s132 = sphi 0, %s118
      %s138 = sphi 0, %s140
      %s141 = sphi 0, %s138
      %s142 = sphi 0, %s141
      %s158 = sphi 0, %s142
    $region4: #{tpu_custom_call.1} parent=1 // loop_header_branch
      %21 = sbr.rel (%p19) target = $region8
    $region5: #{tpu_custom_call.1} parent=1 // loop_body
      %s23 = ssub.s32 %s18, 1
      %s24 = ssub.s32 %s18, 2
      %s25 = sadd.s32 %s18, 1
      %s26 = ssub.s32 %s18, %s25
      %p27 = scmp.eq.s32.totalorder %s26, 0
      %s29 = sadd.s32 %s28, 1
      %s30 = scalar_select %p27, %s28, %s29
      %p33 = pneg %p27
      %p34 = scmp.eq.s32.totalorder %s18, 1
      %p35 = por %p33, %p34
      %p36 = scmp.ne.s32.totalorder %s28, %s31
      %p37 = scmp.eq.s32.totalorder %s18, 0
      %p38 = por %p36, %p37
      %p39 = scmp.ne.s32.totalorder %s28, %s31
      %p40 = scmp.eq.s32.totalorder %s23, 1
      %p41 = por %p39, %p40
      %p42 = scmp.ne.s32.totalorder %s31, %s32
      %p43 = scmp.eq.s32.totalorder %s23, 0
      %p44 = por %p42, %p43
      %p45 = scmp.ne.s32.totalorder %s31, %s32
      %p46 = scmp.eq.s32.totalorder %s24, 1
      %p47 = por %p45, %p46
      %p49 = scmp.ne.s32.totalorder %s32, %s48
      %p50 = scmp.eq.s32.totalorder %s24, 0
      %p51 = por %p49, %p50
      %s53 = sadd.s32 %s52, 1
      %p56 = scmp.eq.s32.totalorder %s18, 1
      %p57 = scmp.ne.s32.totalorder %s52, %s54
      %p58 = scmp.eq.s32.totalorder %s18, 0
      %p59 = por %p57, %p58
      %p60 = scmp.ne.s32.totalorder %s52, %s54
      %p61 = scmp.eq.s32.totalorder %s23, 1
      %p62 = por %p60, %p61
      %p63 = scmp.ne.s32.totalorder %s54, %s55
      %p64 = scmp.eq.s32.totalorder %s23, 0
      %p65 = por %p63, %p64
      %p66 = scmp.ne.s32.totalorder %s54, %s55
      %p67 = scmp.eq.s32.totalorder %s24, 1
      %p68 = por %p66, %p67
      %p70 = scmp.ne.s32.totalorder %s55, %s69
      %p71 = scmp.eq.s32.totalorder %s24, 0
      %p72 = por %p70, %p71
      %s74 = sadd.s32 %s73, 1
      %p77 = scmp.eq.s32.totalorder %s18, 1
      %p78 = scmp.ne.s32.totalorder %s73, %s75
      %p79 = scmp.eq.s32.totalorder %s18, 0
      %p80 = por %p78, %p79
      %p81 = scmp.ne.s32.totalorder %s73, %s75
      %p82 = scmp.eq.s32.totalorder %s23, 1
      %p83 = por %p81, %p82
      %p84 = scmp.ne.s32.totalorder %s75, %s76
      %p85 = scmp.eq.s32.totalorder %s23, 0
      %p86 = por %p84, %p85
      %p87 = scmp.ne.s32.totalorder %s75, %s76
      %p88 = scmp.eq.s32.totalorder %s24, 1
      %p89 = por %p87, %p88
      %p91 = scmp.ne.s32.totalorder %s76, %s90
      %p92 = scmp.eq.s32.totalorder %s24, 0
      %p93 = por %p91, %p92
      %s95 = sadd.s32 %s94, 1
      %p98 = scmp.eq.s32.totalorder %s18, 1
      %p99 = scmp.ne.s32.totalorder %s94, %s96
      %p100 = scmp.eq.s32.totalorder %s18, 0
      %p101 = por %p99, %p100
      %p102 = scmp.ne.s32.totalorder %s94, %s96
      %p103 = scmp.eq.s32.totalorder %s23, 1
      %p104 = por %p102, %p103
      %p105 = scmp.ne.s32.totalorder %s96, %s97
      %p106 = scmp.eq.s32.totalorder %s23, 0
      %p107 = por %p105, %p106
      %p108 = scmp.ne.s32.totalorder %s96, %s97
      %p109 = scmp.eq.s32.totalorder %s24, 1
      %p110 = por %p108, %p109
      %p112 = scmp.ne.s32.totalorder %s97, %s111
      %p113 = scmp.eq.s32.totalorder %s24, 0
      %p114 = por %p112, %p113
      %s116 = sadd.s32 %s115, 1
      %p119 = scmp.eq.s32.totalorder %s18, 1
      %p120 = scmp.ne.s32.totalorder %s115, %s117
      %p121 = scmp.eq.s32.totalorder %s18, 0
      %p122 = por %p120, %p121
      %p123 = scmp.ne.s32.totalorder %s115, %s117
      %p124 = scmp.eq.s32.totalorder %s23, 1
      %p125 = por %p123, %p124
      %p126 = scmp.ne.s32.totalorder %s117, %s118
      %p127 = scmp.eq.s32.totalorder %s23, 0
      %p128 = por %p126, %p127
      %p129 = scmp.ne.s32.totalorder %s117, %s118
      %p130 = scmp.eq.s32.totalorder %s24, 1
      %p131 = por %p129, %p130
      %p133 = scmp.ne.s32.totalorder %s118, %s132
      %p134 = scmp.eq.s32.totalorder %s24, 0
      %p135 = por %p133, %p134
      %s136 = ssub.s32 %s18, %s25
      %p137 = scmp.eq.s32.totalorder %s136, 0
      %s139 = sadd.s32 %s138, 1
      %s140 = scalar_select %p137, %s138, %s139
      %p143 = pneg %p137
      %p144 = scmp.eq.s32.totalorder %s18, 1
      %p145 = por %p143, %p144
      %p146 = scmp.ne.s32.totalorder %s138, %s141
      %p147 = scmp.eq.s32.totalorder %s18, 0
      %p148 = por %p146, %p147
      %p149 = scmp.ne.s32.totalorder %s138, %s141
      %p150 = scmp.eq.s32.totalorder %s23, 1
      %p151 = por %p149, %p150
      %p152 = scmp.ne.s32.totalorder %s141, %s142
      %p153 = scmp.eq.s32.totalorder %s23, 0
      %p154 = por %p152, %p153
      %p155 = scmp.ne.s32.totalorder %s141, %s142
      %p156 = scmp.eq.s32.totalorder %s24, 1
      %p157 = por %p155, %p156
      %p159 = scmp.ne.s32.totalorder %s142, %s158
      %p160 = scmp.eq.s32.totalorder %s24, 0
      %p161 = por %p159, %p160
      %p162 = scmp.le.s32.totalorder 1, %s18
      %p163 = scmp.lt.s32.totalorder %s18, 3
      %p164 = pnand %p162, %p163
      %p165 = pneg %p164
      // Predicated region
      $region9: #{tpu_custom_call.1} parent=5 // pred_check
        _
      $region10: #{tpu_custom_call.1} parent=5 // pred_check_branch
        %167 = sbr.rel (%p164) target = $region12
      $region11: #{tpu_custom_call.1} parent=5 // pred_region
        %s168 = ssub.s32 %s18, 1
        // Predicated region
        $region13: #{tpu_custom_call.1} parent=11 // pred_check
          %p169 = pneg %p65
        $region14: #{tpu_custom_call.1} parent=11 // pred_check_branch
          %171 = sbr.rel (%p169) target = $region16
        $region15: #{tpu_custom_call.1} parent=11 // pred_region
          %173 = vsyncadd [#allocation6], 0
          %s175 = sshll.u32 %s1, 4
          %s176 = int_to_ptr.hbm [resolvable:$true] %s175
          %s177 = sshll.u32 [#allocation5], 4
          %s178 = int_to_ptr.vmem [resolvable:$true] %s177
          %180 = dma.hbm_to_vmem [thread:$0]  %s176, 64, %s178, [#allocation6]
        $region16: #{tpu_custom_call.1} parent=11 // pred_fallthru
          _
        // Predicated region
        $region17: #{tpu_custom_call.1} parent=11 // pred_check
          %p181 = pneg %p86
        $region18: #{tpu_custom_call.1} parent=11 // pred_check_branch
          %183 = sbr.rel (%p181) target = $region20
        $region19: #{tpu_custom_call.1} parent=11 // pred_region
          _
        $region20: #{tpu_custom_call.1} parent=11 // pred_fallthru
          _
        // Predicated region
        $region21: #{tpu_custom_call.1} parent=11 // pred_check
          %p184 = pneg %p107
        $region22: #{tpu_custom_call.1} parent=11 // pred_check_branch
          %186 = sbr.rel (%p184) target = $region24
        $region23: #{tpu_custom_call.1} parent=11 // pred_region
          %188 = vsyncadd [#allocation6], 0
          %s190 = sshll.u32 %s3, 4
          %s191 = int_to_ptr.hbm [resolvable:$true] %s190
          %s192 = sshll.u32 [#allocation7], 4
          %s193 = int_to_ptr.vmem [resolvable:$true] %s192
          %195 = dma.hbm_to_vmem [thread:$0]  %s191, 64, %s193, [#allocation6]
        $region24: #{tpu_custom_call.1} parent=11 // pred_fallthru
          _
        // Predicated region
        $region25: #{tpu_custom_call.1} parent=11 // pred_check
          %p196 = pneg %p128
        $region26: #{tpu_custom_call.1} parent=11 // pred_check_branch
          %198 = sbr.rel (%p196) target = $region28
        $region27: #{tpu_custom_call.1} parent=11 // pred_region
          _
        $region28: #{tpu_custom_call.1} parent=11 // pred_fallthru
          _
      $region12: #{tpu_custom_call.1} parent=5 // pred_fallthru
        _
      %p199 = scmp.lt.s32.totalorder %s18, 2
      // Predicated region
      $region29: #{tpu_custom_call.1} parent=5 // pred_check
        %p200 = pneg %p199
      $region30: #{tpu_custom_call.1} parent=5 // pred_check_branch
        %202 = sbr.rel (%p200) target = $region32
      $region31: #{tpu_custom_call.1} parent=5 // pred_region
        // Predicated region
        $region33: #{tpu_custom_call.1} parent=31 // pred_check
          %p203 = pneg %p38
        $region34: #{tpu_custom_call.1} parent=31 // pred_check_branch
          %205 = sbr.rel (%p203) target = $region36
        $region35: #{tpu_custom_call.1} parent=31 // pred_region
          %s206 = sand.u32 %s28, 1
          %s207 = scalar_lea.sflag [#allocation3], %s206
          %s208 = sand.u32 %s28, 1
          %s209 = smul.addr %s208, 8
          %s210 = scalar_lea.vmem [#allocation2], %s209
          %212 = vsyncadd %s207, 0
          %s213 = smul.addr %s18, 2
          %s214 = smul.addr %s213, 4
          %s215 = scalar_lea.hbm %s0, %s214
          %s217 = sshll.u32 %s215, 4
          %s218 = int_to_ptr.hbm [resolvable:$true] %s217
          %s219 = sshll.u32 %s210, 4
          %s220 = int_to_ptr.vmem [resolvable:$true] %s219
          %222 = dma.hbm_to_vmem [thread:$0]  %s218, 128, %s220, %s207
        $region36: #{tpu_custom_call.1} parent=31 // pred_fallthru
          _
      $region32: #{tpu_custom_call.1} parent=5 // pred_fallthru
        _
      %p223 = scmp.le.s32.totalorder 1, %s18
      %p224 = scmp.lt.s32.totalorder %s18, 3
      %p225 = pnand %p223, %p224
      %p226 = pneg %p225
      // Predicated region
      $region37: #{tpu_custom_call.1} parent=5 // pred_check
        _
      $region38: #{tpu_custom_call.1} parent=5 // pred_check_branch
        %228 = sbr.rel (%p225) target = $region40
      $region39: #{tpu_custom_call.1} parent=5 // pred_region
        %s229 = ssub.s32 %s18, 1
        %s230 = sand.u32 %s31, 1
        %s231 = scalar_lea.sflag [#allocation3], %s230
        %s232 = sand.u32 %s31, 1
        %s233 = smul.addr %s232, 8
        %s234 = scalar_lea.vmem [#allocation2], %s233
        // Predicated region
        $region41: #{tpu_custom_call.1} parent=39 // pred_check
          %p235 = pneg %p44
        $region42: #{tpu_custom_call.1} parent=39 // pred_check_branch
          %237 = sbr.rel (%p235) target = $region44
        $region43: #{tpu_custom_call.1} parent=39 // pred_region
          %239 = dma.done %s231, 128
        $region44: #{tpu_custom_call.1} parent=39 // pred_fallthru
          _
        // Predicated region
        $region45: #{tpu_custom_call.1} parent=39 // pred_check
          %p240 = pneg %p65
        $region46: #{tpu_custom_call.1} parent=39 // pred_check_branch
          %242 = sbr.rel (%p240) target = $region48
        $region47: #{tpu_custom_call.1} parent=39 // pred_region
          %244 = dma.done [#allocation6], 64
        $region48: #{tpu_custom_call.1} parent=39 // pred_fallthru
          _
        // Predicated region
        $region49: #{tpu_custom_call.1} parent=39 // pred_check
          %p245 = pneg %p107
        $region50: #{tpu_custom_call.1} parent=39 // pred_check_branch
          %247 = sbr.rel (%p245) target = $region52
        $region51: #{tpu_custom_call.1} parent=39 // pred_region
          %249 = dma.done [#allocation6], 64
        $region52: #{tpu_custom_call.1} parent=39 // pred_fallthru
          _
        %s250 = sand.u32 %s31, 1
        %s251 = scalar_lea.sflag [#allocation3], %s250
        %s252 = sand.u32 %s31, 1
        %s253 = smul.addr %s252, 8
        %s254 = scalar_lea.vmem [#allocation2], %s253
        %p255 = pneg %p44
        %p256 = pneg %p41
        %p257 = pneg %p65
        %p258 = pneg %p62
        %p259 = pneg %p86
        %p260 = pneg %p83
        %p261 = pneg %p107
        %p262 = pneg %p104
        %p263 = pneg %p128
        %p264 = pneg %p125
        %p265 = pneg %p154
        %p266 = pneg %p151
        %s267 = sand.u32 %s141, 1
        %s268 = scalar_lea.sflag [#allocation4], %s267
        %s269 = sand.u32 %s141, 1
        %s270 = smul.addr %s269, 8
        %s271 = scalar_lea.vmem [#allocation8], %s270
        %v272 = vld [vmem:[%s234] sm:$0xff]
        %274 = vst [vmem:[#allocation1] ss:$2 sm:$0xff] %v272
        %v275 = vld.sshfl [vmem:[#allocation1] sm:$0xff pattern:$0x75316420]
        %v276 = vld.sshfl [vmem:[#allocation1 + $0x8] sm:$0xff pattern:$0x75316420]
        %vm279 = vcmask 1043456
        %v280 = vsel %vm279, %v275, 0.0
        %v281 = vsel %vm279, %v276, 0.0
        %v282 = vadd.f32 %v280, %v281
        %283 = vadd.xlane.f32.xlu0 %v282
        %v284 = vpop.xlane.xlu0 %283
        %v285 = vld [vmem:[#allocation5] sm:$0xf]
        %v286 = vld [vmem:[%s2] sm:$0x1]
        %v288 = vlaneseq
        %v289 = vand.u32 %v288, 127
        %v290 = vperm.slane %v284, %v289
        %vm291 = vcmask 31744
        %v292 = vsel %vm291, %v290, 0
        %v295 = vsel %vm279, %v285, 0
        %297 = vmatpush.msra.mxu0 0.0
        %298 = vmatpush.msra.mxu0 0.0
        %299 = vmatpush.msra.mxu0 0.0
        %300 = vmatpush.msra.mxu0 0.0
        %301 = vmatpush.msra.mxu0 0.0
        %302 = vmatpush.msra.mxu0 0.0
        %303 = vmatpush.msra.mxu0 0.0
        %304 = vmatpush.msra.mxu0 0.0
        %305 = vmatpush.msra.mxu0 0.0
        %306 = vmatpush.msra.mxu0 0.0
        %307 = vmatpush.msra.mxu0 0.0
        %308 = vmatpush.msra.mxu0 0.0
        %309 = vmatpush.msra.mxu0 0.0
        %310 = vmatpush.msra.mxu0 0.0
        %311 = vmatpush.msra.mxu0 0.0
        %312 = vmatpush.msra.mxu0 %v295
        %313 = vmatmul.f32.gmra.mxu0 %v292
        %v314 = vpop.f32.mrf.mxu0
        %v315 = vadd.f32 %v286, %v314
        %316 = vdwg.mxu0
        %v317 = vmax.f32 %v315, 0.0
        %v318 = vld [vmem:[#allocation7] sm:$0xf]
        %v319 = vld [vmem:[%s4] sm:$0x1]
        %v321 = vsel %vm291, %v317, 0
        %v324 = vsel %vm279, %v318, 0
        %326 = vmatpush.msra.mxu0 0.0
        %327 = vmatpush.msra.mxu0 0.0
        %328 = vmatpush.msra.mxu0 0.0
        %329 = vmatpush.msra.mxu0 0.0
        %330 = vmatpush.msra.mxu0 0.0
        %331 = vmatpush.msra.mxu0 0.0
        %332 = vmatpush.msra.mxu0 0.0
        %333 = vmatpush.msra.mxu0 0.0
        %334 = vmatpush.msra.mxu0 0.0
        %335 = vmatpush.msra.mxu0 0.0
        %336 = vmatpush.msra.mxu0 0.0
        %337 = vmatpush.msra.mxu0 0.0
        %338 = vmatpush.msra.mxu0 0.0
        %339 = vmatpush.msra.mxu0 0.0
        %340 = vmatpush.msra.mxu0 0.0
        %341 = vmatpush.msra.mxu0 %v324
        %342 = vmatmul.f32.gmra.mxu0 %v321
        %v343 = vpop.f32.mrf.mxu0
        %v344 = vadd.f32 %v319, %v343
        %345 = vdwg.mxu0
        %v346 = vadd.f32 %v344, 3.0
        %v347 = vmax.f32 %v346, 0.0
        %v348 = vmin.f32 %v347, 6.0
        %v349 = vmul.f32 %v348, 0.16666667
        %v350 = vperm.slane %v349, 0
        %v351 = vlaneseq
        %v352 = vshrl.u32 %v351, 7
        %354 = vset.pattern.permute.xlu0 %v352
        %355 = vperm.xlu0 %354, %v350
        %v356 = vpop.permute.xlu0 %355
        %v359 = vunpack.c.l.s4 839922192
        %v360 = vunpack.c.0.s8 %v359
        %v361 = vperm.slane %v356, %v360
        %v363 = vmul.f32 %v272, %v361
        %364 = vst [vmem:[%s271] sm:$0xff] %v363
        %s365 = sand.u32 %s141, 1
        %s366 = scalar_lea.sflag [#allocation4], %s365
        %s367 = sand.u32 %s141, 1
        %s368 = smul.addr %s367, 8
        %s369 = scalar_lea.vmem [#allocation8], %s368
        // Predicated region
        $region53: #{tpu_custom_call.1} parent=39 // pred_check
          %p370 = pneg %p151
        $region54: #{tpu_custom_call.1} parent=39 // pred_check_branch
          %372 = sbr.rel (%p370) target = $region56
        $region55: #{tpu_custom_call.1} parent=39 // pred_region
          %374 = vsyncadd %s366, 0
          %s375 = smul.addr %s23, 2
          %s376 = smul.addr %s375, 4
          %s377 = scalar_lea.hbm %s5, %s376
          %s379 = sshll.u32 %s369, 4
          %s380 = int_to_ptr.vmem [resolvable:$true] %s379
          %s381 = sshll.u32 %s377, 4
          %s382 = int_to_ptr.hbm [resolvable:$true] %s381
          %384 = dma.vmem_to_hbm [thread:$0]  %s380, 128, %s382, %s366
        $region56: #{tpu_custom_call.1} parent=39 // pred_fallthru
          _
      $region40: #{tpu_custom_call.1} parent=5 // pred_fallthru
        _
      %p385 = scmp.le.s32.totalorder 2, %s18
      // Predicated region
      $region57: #{tpu_custom_call.1} parent=5 // pred_check
        %p386 = pneg %p385
      $region58: #{tpu_custom_call.1} parent=5 // pred_check_branch
        %388 = sbr.rel (%p386) target = $region60
      $region59: #{tpu_custom_call.1} parent=5 // pred_region
        %s389 = ssub.s32 %s18, 2
        // Predicated region
        $region61: #{tpu_custom_call.1} parent=59 // pred_check
          %p390 = pneg %p157
        $region62: #{tpu_custom_call.1} parent=59 // pred_check_branch
          %392 = sbr.rel (%p390) target = $region64
        $region63: #{tpu_custom_call.1} parent=59 // pred_region
          %s393 = sand.u32 %s142, 1
          %s394 = scalar_lea.sflag [#allocation4], %s393
          %s395 = sand.u32 %s142, 1
          %s396 = smul.addr %s395, 8
          %s397 = scalar_lea.vmem [#allocation8], %s396
          %399 = dma.done %s394, 128
        $region64: #{tpu_custom_call.1} parent=59 // pred_fallthru
          _
      $region60: #{tpu_custom_call.1} parent=5 // pred_fallthru
        _
    $region6: #{tpu_custom_call.1} parent=1 // loop_footer
      %s22 = sadd.s32 1, %s18
    $region7: #{tpu_custom_call.1} parent=1 // loop_footer_branch
      %17 = sbr.rel target = $region3
    $region8: #{tpu_custom_call.1} parent=1 // loop_exit
      _
    %400 = vsyncpa [#allocation3], 1
    %s401 = scalar_lea.sflag [#allocation3], 1
    %402 = vsyncpa %s401, 1
    %403 = vsyncpa [#allocation6], 1
    %404 = vsyncpa [#allocation4], 1
    %s405 = scalar_lea.sflag [#allocation4], 1
    %406 = vsyncpa %s405, 1

</llo_original>
